<compile_context>
chip_gen: v6e
topology: v6e:2x2x1
jax: 0.10.0
libtpu: 0.0.40
codegen_flags: <defaults>
</compile_context>

<pallas_src>
import jax
import jax.numpy as jnp
from jax.experimental import pallas as pl
from jax.experimental.pallas import tpu as pltpu

HIDDEN = 8          # fc1 output features (nn.Linear(state_dims, 8))
HIDDEN_PAD = 128    # hidden dim padded to a full lane tile


def qnet_kernel(x_ref, w1_ref, b1_ref, w2_ref, o_ref):
    # x_ref:  (TB, D)    batch tile (the only stream that moves per grid step)
    # w1_ref: (D, HP)    fc1 weights, hidden dim zero-padded to 128 (resident)
    # b1_ref: (1, HP)    fc1 bias padded; col HP-1 == 1.0 (constant hidden unit)
    # w2_ref: (HP, 1)    fc2 weights as a column; row HP-1 == fc2 bias (folded)
    # o_ref:  (TB, 1)
    h = jnp.dot(x_ref[...], w1_ref[...], preferred_element_type=jnp.float32)
    h = jnp.maximum(h + b1_ref[...], 0.0)          # fc1 bias + ReLU (f32 accumulate)
    h = h.astype(w2_ref.dtype)                     # bf16 here on v6e/v7x halves vst/vld
    o = jnp.dot(h, w2_ref[...], preferred_element_type=jnp.float32)   # (TB, 1)
    o_ref[...] = jnp.maximum(o, 0.0).astype(o_ref.dtype)              # final ReLU


def pad_qnet_params(w1, b1, w2, b2, compute_dtype=jnp.float32):
    """Pad weights once (hoisted out of the forward path).

    w1: (state_dims, 8), b1: (8,), w2: (8, 1), b2: (1,)  (transposed vs nn.Linear)
    Returns (w1_pad, b1_pad, w2_pad):
      w1_pad: (D, 128) compute_dtype,  b1_pad: (1, 128) f32 with col 127 == 1.0,
      w2_pad: (128, 1) compute_dtype with row 127 == b2 (bias folded).
    """
    D, H = w1.shape
    assert H < HIDDEN_PAD, "folded-bias trick needs a spare (constant) hidden unit"
    w1_pad = jnp.zeros((D, HIDDEN_PAD), compute_dtype).at[:, :H].set(
        w1.astype(compute_dtype))
    b1_pad = (jnp.zeros((1, HIDDEN_PAD), jnp.float32)
              .at[0, :H].set(b1.astype(jnp.float32))
              .at[0, HIDDEN_PAD - 1].set(1.0))
    w2_pad = (jnp.zeros((HIDDEN_PAD, 1), compute_dtype)
              .at[:H, 0].set(w2[:, 0].astype(compute_dtype))
              .at[HIDDEN_PAD - 1, 0].set(b2[0].astype(compute_dtype)))
    return w1_pad, b1_pad, w2_pad


def q_net_forward(x, padded_params, *, block_rows=8192, small_batch_threshold=1024):
    """Q_Net forward.

    x: (B, state_dims) or (state_dims,); padded_params from pad_qnet_params().
    Returns (B, 1) float32 — or (1,) for a 1-D input (PyTorch forward's spec).
    On v7x, pass block_rows ~= ceil(B/2) so the parallel batch axis feeds both TCs.
    """
    w1_pad, b1_pad, w2_pad = padded_params
    compute_dtype = w1_pad.dtype

    # Single-state path: plain XLA beats pallas_call dispatch outright.
    if x.ndim == 1:
        h = jnp.maximum(x.astype(compute_dtype) @ w1_pad + b1_pad[0], 0.0)
        o = jnp.maximum(h.astype(compute_dtype) @ w2_pad, 0.0)
        return o.astype(jnp.float32)

    B, D = x.shape
    HP = HIDDEN_PAD

    # Small-batch fast path: fused XLA HLO wins for a 2-layer, 8-hidden MLP.
    if B <= small_batch_threshold:
        h = jnp.maximum(x.astype(compute_dtype) @ w1_pad + b1_pad, 0.0)
        return jnp.maximum(h.astype(compute_dtype) @ w2_pad, 0.0).astype(jnp.float32)

    # Batch tile: as large as useful (default: whole batch => grid of 1 on
    # single-TC chips); capped so 2 double-buffered x tiles stay well under
    # v5e's 16 MiB scoped VMEM even if state_dims grows.
    itemsize = jnp.dtype(compute_dtype).itemsize
    max_tile_bytes = 6 * 1024 * 1024
    row_cap = max(8, (max_tile_bytes // max(1, D * itemsize)) // 8 * 8)
    tb = min(block_rows, B, row_cap)
    if tb < B:
        tb = max(8, (tb // 8) * 8)     # sublane-aligned when actually tiling
    grid = pl.cdiv(B, tb)
    b_pad = grid * tb                  # over-allocate output; slice back to B

    cost = pl.CostEstimate(
        flops=int(2 * b_pad * D * HP + 2 * b_pad * HP),
        transcendentals=0,
        bytes_accessed=int(itemsize * (B * D + D * HP + HP) + 4 * (HP + b_pad)),
    )

    out = pl.pallas_call(
        qnet_kernel,
        out_shape=jax.ShapeDtypeStruct((b_pad, 1), jnp.float32),
        grid_spec=pltpu.PrefetchScalarGridSpec(
            num_scalar_prefetch=0,
            grid=(grid,),
            in_specs=[
                pl.BlockSpec((tb, D), lambda i: (i, 0)),    # x: tiled over batch
                pl.BlockSpec((D, HP), lambda i: (0, 0)),    # w1: resident
                pl.BlockSpec((1, HP), lambda i: (0, 0)),    # b1 (+ const unit): resident
                pl.BlockSpec((HP, 1), lambda i: (0, 0)),    # w2 (+ folded b2): resident
            ],
            out_specs=pl.BlockSpec((tb, 1), lambda i: (i, 0)),
        ),
        compiler_params=pltpu.CompilerParams(
            dimension_semantics=("parallel",),
        ),
        cost_estimate=cost,
    )(x.astype(compute_dtype), w1_pad, b1_pad, w2_pad)

    return out[:B] if b_pad != B else out


def init_params(key, state_dims, hidden=HIDDEN, out_dims=1):
    """Deterministic init mirroring nn.Linear shapes (stored transposed: (in, out))."""
    k1, k2, k3, k4 = jax.random.split(key, 4)
    bound1 = 1.0 / (state_dims ** 0.5)
    bound2 = 1.0 / (hidden ** 0.5)
    w1 = jax.random.uniform(k1, (state_dims, hidden), jnp.float32, -bound1, bound1)
    b1 = jax.random.uniform(k2, (hidden,), jnp.float32, -bound1, bound1)
    w2 = jax.random.uniform(k3, (hidden, out_dims), jnp.float32, -bound2, bound2)
    b2 = jax.random.uniform(k4, (out_dims,), jnp.float32, -bound2, bound2)
    return w1, b1, w2, b2


if __name__ == "__main__":
    key = jax.random.PRNGKey(0)
    kx, kp, kx2 = jax.random.split(key, 3)

    state_dims = 32
    w1, b1, w2, b2 = init_params(kp, state_dims)

    def ref_fwd(xx):
        return jnp.maximum(jnp.maximum(xx @ w1 + b1, 0.0) @ w2 + b2, 0.0)

    params_f32 = pad_qnet_params(w1, b1, w2, b2)                      # pad once (hoisted)

    # 1) Pallas path, single grid step (force past the small-batch fast path).
    batch = 512
    x = jax.random.normal(kx, (batch, state_dims), jnp.float32)
    out = jax.block_until_ready(q_net_forward(x, params_f32, small_batch_threshold=0))
    assert out.shape == (batch, 1)
    assert jnp.allclose(out, ref_fwd(x), atol=1e-4, rtol=1e-4)

    # 2) Pallas path, multi-step grid with a ragged final block.
    batch2 = 300
    x2 = jax.random.normal(kx2, (batch2, state_dims), jnp.float32)
    out2 = jax.block_until_ready(
        q_net_forward(x2, params_f32, block_rows=128, small_batch_threshold=0))
    assert out2.shape == (batch2, 1)
    assert jnp.allclose(out2, ref_fwd(x2), atol=1e-4, rtol=1e-4)

    # 3) bf16 compute path (v6e/v7x feedback): bf16 x/w1/h, f32 MXU accumulate.
    params_bf16 = pad_qnet_params(w1, b1, w2, b2, compute_dtype=jnp.bfloat16)
    out_bf = jax.block_until_ready(
        q_net_forward(x, params_bf16, small_batch_threshold=0))
    assert out_bf.shape == (batch, 1)
    assert jnp.allclose(out_bf, ref_fwd(x), atol=5e-2, rtol=5e-2)

    # 4) Small-batch and single-state fast paths (plain XLA by design).
    out_small = jax.block_until_ready(q_net_forward(x[:4], params_f32))
    assert jnp.allclose(out_small, ref_fwd(x[:4]), atol=1e-4, rtol=1e-4)
    out_single = jax.block_until_ready(q_net_forward(x[0], params_f32))
    assert out_single.shape == (1,)
    assert jnp.allclose(out_single, ref_fwd(x[0:1])[0], atol=1e-4, rtol=1e-4)

    print("KERNEL_OK")
</pallas_src>

<mosaic_0001>
module attributes {stable_mosaic.version = 11 : i64} {
  func.func @qnet_kernel(%arg0: i32, %arg1: memref<512x32xf32, #tpu.memory_space<vmem>>, %arg2: memref<32x128xf32, #tpu.memory_space<vmem>>, %arg3: memref<1x128xf32, #tpu.memory_space<vmem>>, %arg4: memref<128x1xf32, #tpu.memory_space<vmem>>, %arg5: memref<512x1xf32, #tpu.memory_space<vmem>>) attributes {dimension_semantics = [#tpu.dimension_semantics<parallel>], iteration_bounds = array<i64: 1>, scalar_prefetch = 0 : i64, scratch_operands = 0 : i64, tpu.core_type = #tpu.core_type<tc>, window_params = [{transform_indices = @transform_0, window_bounds = array<i64: 512, 32>}, {pipeline_mode = #tpu.pipeline_mode<synchronous>, transform_indices = @transform_1, window_bounds = array<i64: 32, 128>}, {pipeline_mode = #tpu.pipeline_mode<synchronous>, transform_indices = @transform_2, window_bounds = array<i64: 1, 128>}, {pipeline_mode = #tpu.pipeline_mode<synchronous>, transform_indices = @transform_3, window_bounds = array<i64: 128, 1>}, {transform_indices = @transform_4, window_bounds = array<i64: 512, 1>}]} {
    %c0 = arith.constant 0 : index
    %c0_0 = arith.constant 0 : index
    %0 = vector.load %arg1[%c0, %c0_0] : memref<512x32xf32, #tpu.memory_space<vmem>>, vector<512x32xf32>
    %c0_1 = arith.constant 0 : index
    %c0_2 = arith.constant 0 : index
    %1 = vector.load %arg2[%c0_1, %c0_2] : memref<32x128xf32, #tpu.memory_space<vmem>>, vector<32x128xf32>
    %cst = arith.constant dense<0.000000e+00> : vector<512x128xf32>
    %2 = tpu.matmul %0, %1, %cst {dimension_numbers = #tpu.dot_dimension_numbers<[1], [0], [0], [1], [0, 0, 1, 1], [], []>} : vector<512x32xf32>, vector<32x128xf32>, vector<512x128xf32> -> vector<512x128xf32>
    %c0_3 = arith.constant 0 : index
    %c0_4 = arith.constant 0 : index
    %3 = vector.load %arg3[%c0_3, %c0_4] : memref<1x128xf32, #tpu.memory_space<vmem>>, vector<1x128xf32>
    %4 = vector.broadcast %3 : vector<1x128xf32> to vector<512x128xf32>
    %5 = arith.addf %2, %4 : vector<512x128xf32>
    %cst_5 = arith.constant 0.000000e+00 : f32
    %6 = vector.broadcast %cst_5 : f32 to vector<512x128xf32>
    %7 = arith.maximumf %5, %6 : vector<512x128xf32>
    %c0_6 = arith.constant 0 : index
    %c0_7 = arith.constant 0 : index
    %8 = vector.load %arg4[%c0_6, %c0_7] : memref<128x1xf32, #tpu.memory_space<vmem>>, vector<128x1xf32>
    %cst_8 = arith.constant dense<0.000000e+00> : vector<512x1xf32>
    %9 = tpu.matmul %7, %8, %cst_8 {dimension_numbers = #tpu.dot_dimension_numbers<[1], [0], [0], [1], [0, 0, 1, 1], [], []>} : vector<512x128xf32>, vector<128x1xf32>, vector<512x1xf32> -> vector<512x1xf32>
    %cst_9 = arith.constant 0.000000e+00 : f32
    %10 = vector.broadcast %cst_9 : f32 to vector<512x1xf32>
    %11 = arith.maximumf %9, %10 : vector<512x1xf32>
    %c0_10 = arith.constant 0 : index
    %c0_11 = arith.constant 0 : index
    %12 = vector.load %arg5[%c0_10, %c0_11] : memref<512x1xf32, #tpu.memory_space<vmem>>, vector<512x1xf32>
    tpu.vector_store %arg5[%c0_10, %c0_11], %11 {strides = array<i32>} : memref<512x1xf32, #tpu.memory_space<vmem>>, vector<512x1xf32>,
    return
  }
  func.func @transform_0(%arg0: i32) -> (i32, i32) {
    %c0_i32 = arith.constant 0 : i32
    %c0_i32_0 = arith.constant 0 : i32
    return %arg0, %c0_i32 : i32, i32
  }
  func.func @transform_1(%arg0: i32) -> (i32, i32) {
    %c0_i32 = arith.constant 0 : i32
    %c0_i32_0 = arith.constant 0 : i32
    %c0_i32_1 = arith.constant 0 : i32
    return %c0_i32, %c0_i32_0 : i32, i32
  }
  func.func @transform_2(%arg0: i32) -> (i32, i32) {
    %c0_i32 = arith.constant 0 : i32
    %c0_i32_0 = arith.constant 0 : i32
    %c0_i32_1 = arith.constant 0 : i32
    return %c0_i32, %c0_i32_0 : i32, i32
  }
  func.func @transform_3(%arg0: i32) -> (i32, i32) {
    %c0_i32 = arith.constant 0 : i32
    %c0_i32_0 = arith.constant 0 : i32
    %c0_i32_1 = arith.constant 0 : i32
    return %c0_i32, %c0_i32_0 : i32, i32
  }
  func.func @transform_4(%arg0: i32) -> (i32, i32) {
    %c0_i32 = arith.constant 0 : i32
    %c0_i32_0 = arith.constant 0 : i32
    return %arg0, %c0_i32 : i32, i32
  }
}

</mosaic_0001>

<llo_original>
// kernel: tpu_custom_call.1
$region0: #{tpu_custom_call.1}
  #allocation0 [shape = 'u32[]', space=smem, size = 0x4, offset = 0x4, fixed_abs, tag = 'smem constant byte address 0x4 - core index']
  #allocation1 [shape = 'u32[144,128]{1,0:T(1,128)}', space=vmem, size = 0x12000, scoped, tag = 'internal scratch']
  %s0 = inlined_call_operand.vmem [shape: f32[512,32], index: 0, kind: input, shape index: {}]
  %s1 = inlined_call_operand.vmem [shape: f32[32,128], index: 1, kind: input, shape index: {}]
  %s2 = inlined_call_operand.vmem [shape: f32[1,128], index: 2, kind: input, shape index: {}]
  %s3 = inlined_call_operand.vmem [shape: f32[128,1], index: 3, kind: input, shape index: {}]
  %s4 = inlined_call_operand.vmem [shape: f32[512,1], index: 4, kind: output, shape index: {}]
  %s5 = sld [smem:[#allocation0]]
  $region26: #{tpu_custom_call.1} parent=0
    _
  %s7 = ssub.s32 1, %s5
  %s8 = scalar_select 0, %s7, %s5
  // Predicated region
  $region2: #{tpu_custom_call.1} parent=0 // pred_check
    _
  $region3: #{tpu_custom_call.1} parent=0 // pred_check_branch
    %10 = sbr.rel (0) target = $region5
  $region4: #{tpu_custom_call.1} parent=0 // pred_region
    _
  $region5: #{tpu_custom_call.1} parent=0 // pred_fallthru
    _
  // Predicated region
  $region6: #{tpu_custom_call.1} parent=0 // pred_check
    _
  $region7: #{tpu_custom_call.1} parent=0 // pred_check_branch
    %12 = sbr.rel (0) target = $region9
  $region8: #{tpu_custom_call.1} parent=0 // pred_region
    _
  $region9: #{tpu_custom_call.1} parent=0 // pred_fallthru
    _
  // Predicated region
  $region10: #{tpu_custom_call.1} parent=0 // pred_check
    _
  $region11: #{tpu_custom_call.1} parent=0 // pred_check_branch
    %14 = sbr.rel (0) target = $region13
  $region12: #{tpu_custom_call.1} parent=0 // pred_region
    _
  $region13: #{tpu_custom_call.1} parent=0 // pred_fallthru
    _
  // Predicated region
  $region14: #{tpu_custom_call.1} parent=0 // pred_check
    _
  $region15: #{tpu_custom_call.1} parent=0 // pred_check_branch
    %16 = sbr.rel (0) target = $region17
  $region16: #{tpu_custom_call.1} parent=0 // pred_region
    _
  $region17: #{tpu_custom_call.1} parent=0 // pred_fallthru
    _
  %v17 = vld [vmem:[%s0] sm:$0xff]
  %v18 = vld [vmem:[%s0 + $0x8] sm:$0xff]
  %v19 = vld [vmem:[%s0 + $0x10] sm:$0xff]
  %v20 = vld [vmem:[%s0 + $0x18] sm:$0xff]
  %v21 = vld [vmem:[%s0 + $0x20] sm:$0xff]
  %v22 = vld [vmem:[%s0 + $0x28] sm:$0xff]
  %v23 = vld [vmem:[%s0 + $0x30] sm:$0xff]
  %v24 = vld [vmem:[%s0 + $0x38] sm:$0xff]
  %v25 = vld [vmem:[%s0 + $0x40] sm:$0xff]
  %v26 = vld [vmem:[%s0 + $0x48] sm:$0xff]
  %v27 = vld [vmem:[%s0 + $0x50] sm:$0xff]
  %v28 = vld [vmem:[%s0 + $0x58] sm:$0xff]
  %v29 = vld [vmem:[%s0 + $0x60] sm:$0xff]
  %v30 = vld [vmem:[%s0 + $0x68] sm:$0xff]
  %v31 = vld [vmem:[%s0 + $0x70] sm:$0xff]
  %v32 = vld [vmem:[%s0 + $0x78] sm:$0xff]
  %v33 = vld [vmem:[%s0 + $0x80] sm:$0xff]
  %v34 = vld [vmem:[%s0 + $0x88] sm:$0xff]
  %v35 = vld [vmem:[%s0 + $0x90] sm:$0xff]
  %v36 = vld [vmem:[%s0 + $0x98] sm:$0xff]
  %v37 = vld [vmem:[%s0 + $0xa0] sm:$0xff]
  %v38 = vld [vmem:[%s0 + $0xa8] sm:$0xff]
  %v39 = vld [vmem:[%s0 + $0xb0] sm:$0xff]
  %v40 = vld [vmem:[%s0 + $0xb8] sm:$0xff]
  %v41 = vld [vmem:[%s0 + $0xc0] sm:$0xff]
  %v42 = vld [vmem:[%s0 + $0xc8] sm:$0xff]
  %v43 = vld [vmem:[%s0 + $0xd0] sm:$0xff]
  %v44 = vld [vmem:[%s0 + $0xd8] sm:$0xff]
  %v45 = vld [vmem:[%s0 + $0xe0] sm:$0xff]
  %v46 = vld [vmem:[%s0 + $0xe8] sm:$0xff]
  %v47 = vld [vmem:[%s0 + $0xf0] sm:$0xff]
  %v48 = vld [vmem:[%s0 + $0xf8] sm:$0xff]
  %v49 = vld [vmem:[%s0 + $0x100] sm:$0xff]
  %v50 = vld [vmem:[%s0 + $0x108] sm:$0xff]
  %v51 = vld [vmem:[%s0 + $0x110] sm:$0xff]
  %v52 = vld [vmem:[%s0 + $0x118] sm:$0xff]
  %v53 = vld [vmem:[%s0 + $0x120] sm:$0xff]
  %v54 = vld [vmem:[%s0 + $0x128] sm:$0xff]
  %v55 = vld [vmem:[%s0 + $0x130] sm:$0xff]
  %v56 = vld [vmem:[%s0 + $0x138] sm:$0xff]
  %v57 = vld [vmem:[%s0 + $0x140] sm:$0xff]
  %v58 = vld [vmem:[%s0 + $0x148] sm:$0xff]
  %v59 = vld [vmem:[%s0 + $0x150] sm:$0xff]
  %v60 = vld [vmem:[%s0 + $0x158] sm:$0xff]
  %v61 = vld [vmem:[%s0 + $0x160] sm:$0xff]
  %v62 = vld [vmem:[%s0 + $0x168] sm:$0xff]
  %v63 = vld [vmem:[%s0 + $0x170] sm:$0xff]
  %v64 = vld [vmem:[%s0 + $0x178] sm:$0xff]
  %v65 = vld [vmem:[%s0 + $0x180] sm:$0xff]
  %v66 = vld [vmem:[%s0 + $0x188] sm:$0xff]
  %v67 = vld [vmem:[%s0 + $0x190] sm:$0xff]
  %v68 = vld [vmem:[%s0 + $0x198] sm:$0xff]
  %v69 = vld [vmem:[%s0 + $0x1a0] sm:$0xff]
  %v70 = vld [vmem:[%s0 + $0x1a8] sm:$0xff]
  %v71 = vld [vmem:[%s0 + $0x1b0] sm:$0xff]
  %v72 = vld [vmem:[%s0 + $0x1b8] sm:$0xff]
  %v73 = vld [vmem:[%s0 + $0x1c0] sm:$0xff]
  %v74 = vld [vmem:[%s0 + $0x1c8] sm:$0xff]
  %v75 = vld [vmem:[%s0 + $0x1d0] sm:$0xff]
  %v76 = vld [vmem:[%s0 + $0x1d8] sm:$0xff]
  %v77 = vld [vmem:[%s0 + $0x1e0] sm:$0xff]
  %v78 = vld [vmem:[%s0 + $0x1e8] sm:$0xff]
  %v79 = vld [vmem:[%s0 + $0x1f0] sm:$0xff]
  %v80 = vld [vmem:[%s0 + $0x1f8] sm:$0xff]
  %v81 = vld [vmem:[%s1] sm:$0xff]
  %v82 = vld [vmem:[%s1 + $0x8] sm:$0xff]
  %v83 = vld [vmem:[%s1 + $0x10] sm:$0xff]
  %v84 = vld [vmem:[%s1 + $0x18] sm:$0xff]
  %v85 = vld [vmem:[%s2] sm:$0x1]
  %v87 = vlaneseq
  %v88 = vshrl.u32 %v87, 7
  %v89 = vsub.s32 0, %v88
  %v90 = vrot.slane %v85, %v89
  %vm92 = vcmask 261120
  %v94 = vsel %vm92, %v17, 0
  %v97 = vsel %vm92, %v18, 0
  %v100 = vsel %vm92, %v19, 0
  %v103 = vsel %vm92, %v20, 0
  %v106 = vsel %vm92, %v21, 0
  %v109 = vsel %vm92, %v22, 0
  %v112 = vsel %vm92, %v23, 0
  %v115 = vsel %vm92, %v24, 0
  %v118 = vsel %vm92, %v25, 0
  %v121 = vsel %vm92, %v26, 0
  %v124 = vsel %vm92, %v27, 0
  %v127 = vsel %vm92, %v28, 0
  %v130 = vsel %vm92, %v29, 0
  %v133 = vsel %vm92, %v30, 0
  %v136 = vsel %vm92, %v31, 0
  %v139 = vsel %vm92, %v32, 0
  %v142 = vsel %vm92, %v33, 0
  %v145 = vsel %vm92, %v34, 0
  %v148 = vsel %vm92, %v35, 0
  %v151 = vsel %vm92, %v36, 0
  %v154 = vsel %vm92, %v37, 0
  %v157 = vsel %vm92, %v38, 0
  %v160 = vsel %vm92, %v39, 0
  %v163 = vsel %vm92, %v40, 0
  %v166 = vsel %vm92, %v41, 0
  %v169 = vsel %vm92, %v42, 0
  %v172 = vsel %vm92, %v43, 0
  %v175 = vsel %vm92, %v44, 0
  %v178 = vsel %vm92, %v45, 0
  %v181 = vsel %vm92, %v46, 0
  %v184 = vsel %vm92, %v47, 0
  %v187 = vsel %vm92, %v48, 0
  %v190 = vsel %vm92, %v49, 0
  %v193 = vsel %vm92, %v50, 0
  %v196 = vsel %vm92, %v51, 0
  %v199 = vsel %vm92, %v52, 0
  %v202 = vsel %vm92, %v53, 0
  %v205 = vsel %vm92, %v54, 0
  %v208 = vsel %vm92, %v55, 0
  %v211 = vsel %vm92, %v56, 0
  %v214 = vsel %vm92, %v57, 0
  %v217 = vsel %vm92, %v58, 0
  %v220 = vsel %vm92, %v59, 0
  %v223 = vsel %vm92, %v60, 0
  %v226 = vsel %vm92, %v61, 0
  %v229 = vsel %vm92, %v62, 0
  %v232 = vsel %vm92, %v63, 0
  %v235 = vsel %vm92, %v64, 0
  %v238 = vsel %vm92, %v65, 0
  %v241 = vsel %vm92, %v66, 0
  %v244 = vsel %vm92, %v67, 0
  %v247 = vsel %vm92, %v68, 0
  %v250 = vsel %vm92, %v69, 0
  %v253 = vsel %vm92, %v70, 0
  %v256 = vsel %vm92, %v71, 0
  %v259 = vsel %vm92, %v72, 0
  %v262 = vsel %vm92, %v73, 0
  %v265 = vsel %vm92, %v74, 0
  %v268 = vsel %vm92, %v75, 0
  %v271 = vsel %vm92, %v76, 0
  %v274 = vsel %vm92, %v77, 0
  %v277 = vsel %vm92, %v78, 0
  %v280 = vsel %vm92, %v79, 0
  %v283 = vsel %vm92, %v80, 0
  %285 = vmatprep.subr.mxu0 0.0
  %286 = vmatpush1.msra.mxu0 0.0
  %287 = vmatprep.subr.mxu0 0.0
  %288 = vmatpush1.msra.mxu0 0.0
  %289 = vmatprep.subr.mxu0 0.0
  %290 = vmatpush1.msra.mxu0 0.0
  %291 = vmatprep.subr.mxu0 0.0
  %292 = vmatpush1.msra.mxu0 0.0
  %293 = vmatprep.subr.mxu0 0.0
  %294 = vmatpush1.msra.mxu0 0.0
  %295 = vmatprep.subr.mxu0 0.0
  %296 = vmatpush1.msra.mxu0 0.0
  %297 = vmatprep.subr.mxu0 0.0
  %298 = vmatpush1.msra.mxu0 0.0
  %299 = vmatprep.subr.mxu0 0.0
  %300 = vmatpush1.msra.mxu0 0.0
  %301 = vmatprep.subr.mxu0 0.0
  %302 = vmatpush1.msra.mxu0 0.0
  %303 = vmatprep.subr.mxu0 0.0
  %304 = vmatpush1.msra.mxu0 0.0
  %305 = vmatprep.subr.mxu0 0.0
  %306 = vmatpush1.msra.mxu0 0.0
  %307 = vmatprep.subr.mxu0 0.0
  %308 = vmatpush1.msra.mxu0 0.0
  %309 = vmatprep.subr.mxu0 0.0
  %310 = vmatpush1.msra.mxu0 %v84
  %311 = vmatprep.subr.mxu0 0.0
  %312 = vmatpush1.msra.mxu0 %v83
  %313 = vmatprep.subr.mxu0 0.0
  %314 = vmatpush1.msra.mxu0 %v82
  %315 = vmatprep.subr.mxu0 0.0
  %316 = vmatpush1.msra.mxu0 %v81
  %317 = vmatprep.subr.mxu0 0.0
  %318 = vmatpush2.msra.mxu0 0.0
  %319 = vmatprep.subr.mxu0 0.0
  %320 = vmatpush2.msra.mxu0 0.0
  %321 = vmatprep.subr.mxu0 0.0
  %322 = vmatpush2.msra.mxu0 0.0
  %323 = vmatprep.subr.mxu0 0.0
  %324 = vmatpush2.msra.mxu0 0.0
  %325 = vmatprep.subr.mxu0 0.0
  %326 = vmatpush2.msra.mxu0 0.0
  %327 = vmatprep.subr.mxu0 0.0
  %328 = vmatpush2.msra.mxu0 0.0
  %329 = vmatprep.subr.mxu0 0.0
  %330 = vmatpush2.msra.mxu0 0.0
  %331 = vmatprep.subr.mxu0 0.0
  %332 = vmatpush2.msra.mxu0 0.0
  %333 = vmatprep.subr.mxu0 0.0
  %334 = vmatpush2.msra.mxu0 0.0
  %335 = vmatprep.subr.mxu0 0.0
  %336 = vmatpush2.msra.mxu0 0.0
  %337 = vmatprep.subr.mxu0 0.0
  %338 = vmatpush2.msra.mxu0 0.0
  %339 = vmatprep.subr.mxu0 0.0
  %340 = vmatpush2.msra.mxu0 0.0
  %341 = vmatprep.subr.mxu0 0.0
  %342 = vmatpush2.msra.mxu0 0.0
  %343 = vmatprep.subr.mxu0 0.0
  %344 = vmatpush2.msra.mxu0 0.0
  %345 = vmatprep.subr.mxu0 0.0
  %346 = vmatpush2.msra.mxu0 0.0
  %347 = vmatprep.subr.mxu0 0.0
  %348 = vmatpush2.msra.mxu0 0.0
  %349 = vmatprep.mubr.f32.mxu0 0.0
  %350 = vmatmul.mubr.f32.gmra.mxu0 %v94
  %v351 = vpop.f32.mrf.mxu0
  %v352 = vadd.f32 %v90, %v351
  %v353 = vpop.f32.mrf.mxu0
  %354 = vmatprep.mubr.f32.mxu0 0.0
  %355 = vmatmul.mubr.f32.gmra.mxu0 %v97
  %v356 = vpop.f32.mrf.mxu0
  %v357 = vadd.f32 %v90, %v356
  %v358 = vpop.f32.mrf.mxu0
  %359 = vmatprep.mubr.f32.mxu0 0.0
  %360 = vmatmul.mubr.f32.gmra.mxu0 %v100
  %v361 = vpop.f32.mrf.mxu0
  %v362 = vadd.f32 %v90, %v361
  %v363 = vpop.f32.mrf.mxu0
  %364 = vmatprep.mubr.f32.mxu0 0.0
  %365 = vmatmul.mubr.f32.gmra.mxu0 %v103
  %v366 = vpop.f32.mrf.mxu0
  %v367 = vadd.f32 %v90, %v366
  %v368 = vpop.f32.mrf.mxu0
  %369 = vmatprep.mubr.f32.mxu0 0.0
  %370 = vmatmul.mubr.f32.gmra.mxu0 %v106
  %v371 = vpop.f32.mrf.mxu0
  %v372 = vadd.f32 %v90, %v371
  %v373 = vpop.f32.mrf.mxu0
  %374 = vmatprep.mubr.f32.mxu0 0.0
  %375 = vmatmul.mubr.f32.gmra.mxu0 %v109
  %v376 = vpop.f32.mrf.mxu0
  %v377 = vadd.f32 %v90, %v376
  %v378 = vpop.f32.mrf.mxu0
  %379 = vmatprep.mubr.f32.mxu0 0.0
  %380 = vmatmul.mubr.f32.gmra.mxu0 %v112
  %v381 = vpop.f32.mrf.mxu0
  %v382 = vadd.f32 %v90, %v381
  %v383 = vpop.f32.mrf.mxu0
  %384 = vmatprep.mubr.f32.mxu0 0.0
  %385 = vmatmul.mubr.f32.gmra.mxu0 %v115
  %v386 = vpop.f32.mrf.mxu0
  %v387 = vadd.f32 %v90, %v386
  %v388 = vpop.f32.mrf.mxu0
  %389 = vmatprep.mubr.f32.mxu0 0.0
  %390 = vmatmul.mubr.f32.gmra.mxu0 %v118
  %v391 = vpop.f32.mrf.mxu0
  %v392 = vadd.f32 %v90, %v391
  %v393 = vpop.f32.mrf.mxu0
  %394 = vmatprep.mubr.f32.mxu0 0.0
  %395 = vmatmul.mubr.f32.gmra.mxu0 %v121
  %v396 = vpop.f32.mrf.mxu0
  %v397 = vadd.f32 %v90, %v396
  %v398 = vpop.f32.mrf.mxu0
  %399 = vmatprep.mubr.f32.mxu0 0.0
  %400 = vmatmul.mubr.f32.gmra.mxu0 %v124
  %v401 = vpop.f32.mrf.mxu0
  %v402 = vadd.f32 %v90, %v401
  %v403 = vpop.f32.mrf.mxu0
  %404 = vmatprep.mubr.f32.mxu0 0.0
  %405 = vmatmul.mubr.f32.gmra.mxu0 %v127
  %v406 = vpop.f32.mrf.mxu0
  %v407 = vadd.f32 %v90, %v406
  %v408 = vpop.f32.mrf.mxu0
  %409 = vmatprep.mubr.f32.mxu0 0.0
  %410 = vmatmul.mubr.f32.gmra.mxu0 %v130
  %v411 = vpop.f32.mrf.mxu0
  %v412 = vadd.f32 %v90, %v411
  %v413 = vpop.f32.mrf.mxu0
  %414 = vmatprep.mubr.f32.mxu0 0.0
  %415 = vmatmul.mubr.f32.gmra.mxu0 %v133
  %v416 = vpop.f32.mrf.mxu0
  %v417 = vadd.f32 %v90, %v416
  %v418 = vpop.f32.mrf.mxu0
  %419 = vmatprep.mubr.f32.mxu0 0.0
  %420 = vmatmul.mubr.f32.gmra.mxu0 %v136
  %v421 = vpop.f32.mrf.mxu0
  %v422 = vadd.f32 %v90, %v421
  %v423 = vpop.f32.mrf.mxu0
  %424 = vmatprep.mubr.f32.mxu0 0.0
  %425 = vmatmul.mubr.f32.gmra.mxu0 %v139
  %v426 = vpop.f32.mrf.mxu0
  %v427 = vadd.f32 %v90, %v426
  %v428 = vpop.f32.mrf.mxu0
  %429 = vmatprep.mubr.f32.mxu0 0.0
  %430 = vmatmul.mubr.f32.gmra.mxu0 %v142
  %v431 = vpop.f32.mrf.mxu0
  %v432 = vadd.f32 %v90, %v431
  %v433 = vpop.f32.mrf.mxu0
  %434 = vmatprep.mubr.f32.mxu0 0.0
  %435 = vmatmul.mubr.f32.gmra.mxu0 %v145
  %v436 = vpop.f32.mrf.mxu0
  %v437 = vadd.f32 %v90, %v436
  %v438 = vpop.f32.mrf.mxu0
  %439 = vmatprep.mubr.f32.mxu0 0.0
  %440 = vmatmul.mubr.f32.gmra.mxu0 %v148
  %v441 = vpop.f32.mrf.mxu0
  %v442 = vadd.f32 %v90, %v441
  %v443 = vpop.f32.mrf.mxu0
  %444 = vmatprep.mubr.f32.mxu0 0.0
  %445 = vmatmul.mubr.f32.gmra.mxu0 %v151
  %v446 = vpop.f32.mrf.mxu0
  %v447 = vadd.f32 %v90, %v446
  %v448 = vpop.f32.mrf.mxu0
  %449 = vmatprep.mubr.f32.mxu0 0.0
  %450 = vmatmul.mubr.f32.gmra.mxu0 %v154
  %v451 = vpop.f32.mrf.mxu0
  %v452 = vadd.f32 %v90, %v451
  %v453 = vpop.f32.mrf.mxu0
  %454 = vmatprep.mubr.f32.mxu0 0.0
  %455 = vmatmul.mubr.f32.gmra.mxu0 %v157
  %v456 = vpop.f32.mrf.mxu0
  %v457 = vadd.f32 %v90, %v456
  %v458 = vpop.f32.mrf.mxu0
  %459 = vmatprep.mubr.f32.mxu0 0.0
  %460 = vmatmul.mubr.f32.gmra.mxu0 %v160
  %v461 = vpop.f32.mrf.mxu0
  %v462 = vadd.f32 %v90, %v461
  %v463 = vpop.f32.mrf.mxu0
  %464 = vmatprep.mubr.f32.mxu0 0.0
  %465 = vmatmul.mubr.f32.gmra.mxu0 %v163
  %v466 = vpop.f32.mrf.mxu0
  %v467 = vadd.f32 %v90, %v466
  %v468 = vpop.f32.mrf.mxu0
  %469 = vmatprep.mubr.f32.mxu0 0.0
  %470 = vmatmul.mubr.f32.gmra.mxu0 %v166
  %v471 = vpop.f32.mrf.mxu0
  %v472 = vadd.f32 %v90, %v471
  %v473 = vpop.f32.mrf.mxu0
  %474 = vmatprep.mubr.f32.mxu0 0.0
  %475 = vmatmul.mubr.f32.gmra.mxu0 %v169
  %v476 = vpop.f32.mrf.mxu0
  %v477 = vadd.f32 %v90, %v476
  %v478 = vpop.f32.mrf.mxu0
  %479 = vmatprep.mubr.f32.mxu0 0.0
  %480 = vmatmul.mubr.f32.gmra.mxu0 %v172
  %v481 = vpop.f32.mrf.mxu0
  %v482 = vadd.f32 %v90, %v481
  %v483 = vpop.f32.mrf.mxu0
  %484 = vmatprep.mubr.f32.mxu0 0.0
  %485 = vmatmul.mubr.f32.gmra.mxu0 %v175
  %v486 = vpop.f32.mrf.mxu0
  %v487 = vadd.f32 %v90, %v486
  %v488 = vpop.f32.mrf.mxu0
  %489 = vmatprep.mubr.f32.mxu0 0.0
  %490 = vmatmul.mubr.f32.gmra.mxu0 %v178
  %v491 = vpop.f32.mrf.mxu0
  %v492 = vadd.f32 %v90, %v491
  %v493 = vpop.f32.mrf.mxu0
  %494 = vmatprep.mubr.f32.mxu0 0.0
  %495 = vmatmul.mubr.f32.gmra.mxu0 %v181
  %v496 = vpop.f32.mrf.mxu0
  %v497 = vadd.f32 %v90, %v496
  %v498 = vpop.f32.mrf.mxu0
  %499 = vmatprep.mubr.f32.mxu0 0.0
  %500 = vmatmul.mubr.f32.gmra.mxu0 %v184
  %v501 = vpop.f32.mrf.mxu0
  %v502 = vadd.f32 %v90, %v501
  %v503 = vpop.f32.mrf.mxu0
  %504 = vmatprep.mubr.f32.mxu0 0.0
  %505 = vmatmul.mubr.f32.gmra.mxu0 %v187
  %v506 = vpop.f32.mrf.mxu0
  %v507 = vadd.f32 %v90, %v506
  %v508 = vpop.f32.mrf.mxu0
  %509 = vmatprep.mubr.f32.mxu0 0.0
  %510 = vmatmul.mubr.f32.gmra.mxu0 %v190
  %v511 = vpop.f32.mrf.mxu0
  %v512 = vadd.f32 %v90, %v511
  %v513 = vpop.f32.mrf.mxu0
  %514 = vmatprep.mubr.f32.mxu0 0.0
  %515 = vmatmul.mubr.f32.gmra.mxu0 %v193
  %v516 = vpop.f32.mrf.mxu0
  %v517 = vadd.f32 %v90, %v516
  %v518 = vpop.f32.mrf.mxu0
  %519 = vmatprep.mubr.f32.mxu0 0.0
  %520 = vmatmul.mubr.f32.gmra.mxu0 %v196
  %v521 = vpop.f32.mrf.mxu0
  %v522 = vadd.f32 %v90, %v521
  %v523 = vpop.f32.mrf.mxu0
  %524 = vmatprep.mubr.f32.mxu0 0.0
  %525 = vmatmul.mubr.f32.gmra.mxu0 %v199
  %v526 = vpop.f32.mrf.mxu0
  %v527 = vadd.f32 %v90, %v526
  %v528 = vpop.f32.mrf.mxu0
  %529 = vmatprep.mubr.f32.mxu0 0.0
  %530 = vmatmul.mubr.f32.gmra.mxu0 %v202
  %v531 = vpop.f32.mrf.mxu0
  %v532 = vadd.f32 %v90, %v531
  %v533 = vpop.f32.mrf.mxu0
  %534 = vmatprep.mubr.f32.mxu0 0.0
  %535 = vmatmul.mubr.f32.gmra.mxu0 %v205
  %v536 = vpop.f32.mrf.mxu0
  %v537 = vadd.f32 %v90, %v536
  %v538 = vpop.f32.mrf.mxu0
  %539 = vmatprep.mubr.f32.mxu0 0.0
  %540 = vmatmul.mubr.f32.gmra.mxu0 %v208
  %v541 = vpop.f32.mrf.mxu0
  %v542 = vadd.f32 %v90, %v541
  %v543 = vpop.f32.mrf.mxu0
  %544 = vmatprep.mubr.f32.mxu0 0.0
  %545 = vmatmul.mubr.f32.gmra.mxu0 %v211
  %v546 = vpop.f32.mrf.mxu0
  %v547 = vadd.f32 %v90, %v546
  %v548 = vpop.f32.mrf.mxu0
  %549 = vmatprep.mubr.f32.mxu0 0.0
  %550 = vmatmul.mubr.f32.gmra.mxu0 %v214
  %v551 = vpop.f32.mrf.mxu0
  %v552 = vadd.f32 %v90, %v551
  %v553 = vpop.f32.mrf.mxu0
  %554 = vmatprep.mubr.f32.mxu0 0.0
  %555 = vmatmul.mubr.f32.gmra.mxu0 %v217
  %v556 = vpop.f32.mrf.mxu0
  %v557 = vadd.f32 %v90, %v556
  %v558 = vpop.f32.mrf.mxu0
  %559 = vmatprep.mubr.f32.mxu0 0.0
  %560 = vmatmul.mubr.f32.gmra.mxu0 %v220
  %v561 = vpop.f32.mrf.mxu0
  %v562 = vadd.f32 %v90, %v561
  %v563 = vpop.f32.mrf.mxu0
  %564 = vmatprep.mubr.f32.mxu0 0.0
  %565 = vmatmul.mubr.f32.gmra.mxu0 %v223
  %v566 = vpop.f32.mrf.mxu0
  %v567 = vadd.f32 %v90, %v566
  %v568 = vpop.f32.mrf.mxu0
  %569 = vmatprep.mubr.f32.mxu0 0.0
  %570 = vmatmul.mubr.f32.gmra.mxu0 %v226
  %v571 = vpop.f32.mrf.mxu0
  %v572 = vadd.f32 %v90, %v571
  %v573 = vpop.f32.mrf.mxu0
  %574 = vmatprep.mubr.f32.mxu0 0.0
  %575 = vmatmul.mubr.f32.gmra.mxu0 %v229
  %v576 = vpop.f32.mrf.mxu0
  %v577 = vadd.f32 %v90, %v576
  %v578 = vpop.f32.mrf.mxu0
  %579 = vmatprep.mubr.f32.mxu0 0.0
  %580 = vmatmul.mubr.f32.gmra.mxu0 %v232
  %v581 = vpop.f32.mrf.mxu0
  %v582 = vadd.f32 %v90, %v581
  %v583 = vpop.f32.mrf.mxu0
  %584 = vmatprep.mubr.f32.mxu0 0.0
  %585 = vmatmul.mubr.f32.gmra.mxu0 %v235
  %v586 = vpop.f32.mrf.mxu0
  %v587 = vadd.f32 %v90, %v586
  %v588 = vpop.f32.mrf.mxu0
  %589 = vmatprep.mubr.f32.mxu0 0.0
  %590 = vmatmul.mubr.f32.gmra.mxu0 %v238
  %v591 = vpop.f32.mrf.mxu0
  %v592 = vadd.f32 %v90, %v591
  %v593 = vpop.f32.mrf.mxu0
  %594 = vmatprep.mubr.f32.mxu0 0.0
  %595 = vmatmul.mubr.f32.gmra.mxu0 %v241
  %v596 = vpop.f32.mrf.mxu0
  %v597 = vadd.f32 %v90, %v596
  %v598 = vpop.f32.mrf.mxu0
  %599 = vmatprep.mubr.f32.mxu0 0.0
  %600 = vmatmul.mubr.f32.gmra.mxu0 %v244
  %v601 = vpop.f32.mrf.mxu0
  %v602 = vadd.f32 %v90, %v601
  %v603 = vpop.f32.mrf.mxu0
  %604 = vmatprep.mubr.f32.mxu0 0.0
  %605 = vmatmul.mubr.f32.gmra.mxu0 %v247
  %v606 = vpop.f32.mrf.mxu0
  %v607 = vadd.f32 %v90, %v606
  %v608 = vpop.f32.mrf.mxu0
  %609 = vmatprep.mubr.f32.mxu0 0.0
  %610 = vmatmul.mubr.f32.gmra.mxu0 %v250
  %v611 = vpop.f32.mrf.mxu0
  %v612 = vadd.f32 %v90, %v611
  %v613 = vpop.f32.mrf.mxu0
  %614 = vmatprep.mubr.f32.mxu0 0.0
  %615 = vmatmul.mubr.f32.gmra.mxu0 %v253
  %v616 = vpop.f32.mrf.mxu0
  %v617 = vadd.f32 %v90, %v616
  %v618 = vpop.f32.mrf.mxu0
  %619 = vmatprep.mubr.f32.mxu0 0.0
  %620 = vmatmul.mubr.f32.gmra.mxu0 %v256
  %v621 = vpop.f32.mrf.mxu0
  %v622 = vadd.f32 %v90, %v621
  %v623 = vpop.f32.mrf.mxu0
  %624 = vmatprep.mubr.f32.mxu0 0.0
  %625 = vmatmul.mubr.f32.gmra.mxu0 %v259
  %v626 = vpop.f32.mrf.mxu0
  %v627 = vadd.f32 %v90, %v626
  %v628 = vpop.f32.mrf.mxu0
  %629 = vmatprep.mubr.f32.mxu0 0.0
  %630 = vmatmul.mubr.f32.gmra.mxu0 %v262
  %v631 = vpop.f32.mrf.mxu0
  %v632 = vadd.f32 %v90, %v631
  %v633 = vpop.f32.mrf.mxu0
  %634 = vmatprep.mubr.f32.mxu0 0.0
  %635 = vmatmul.mubr.f32.gmra.mxu0 %v265
  %v636 = vpop.f32.mrf.mxu0
  %v637 = vadd.f32 %v90, %v636
  %v638 = vpop.f32.mrf.mxu0
  %639 = vmatprep.mubr.f32.mxu0 0.0
  %640 = vmatmul.mubr.f32.gmra.mxu0 %v268
  %v641 = vpop.f32.mrf.mxu0
  %v642 = vadd.f32 %v90, %v641
  %v643 = vpop.f32.mrf.mxu0
  %644 = vmatprep.mubr.f32.mxu0 0.0
  %645 = vmatmul.mubr.f32.gmra.mxu0 %v271
  %v646 = vpop.f32.mrf.mxu0
  %v647 = vadd.f32 %v90, %v646
  %v648 = vpop.f32.mrf.mxu0
  %649 = vmatprep.mubr.f32.mxu0 0.0
  %650 = vmatmul.mubr.f32.gmra.mxu0 %v274
  %v651 = vpop.f32.mrf.mxu0
  %v652 = vadd.f32 %v90, %v651
  %v653 = vpop.f32.mrf.mxu0
  %654 = vmatprep.mubr.f32.mxu0 0.0
  %655 = vmatmul.mubr.f32.gmra.mxu0 %v277
  %v656 = vpop.f32.mrf.mxu0
  %v657 = vadd.f32 %v90, %v656
  %v658 = vpop.f32.mrf.mxu0
  %659 = vmatprep.mubr.f32.mxu0 0.0
  %660 = vmatmul.mubr.f32.gmra.mxu0 %v280
  %v661 = vpop.f32.mrf.mxu0
  %v662 = vadd.f32 %v90, %v661
  %v663 = vpop.f32.mrf.mxu0
  %664 = vmatprep.mubr.f32.mxu0 0.0
  %665 = vmatmul.mubr.f32.gmra.mxu0 %v283
  %v666 = vpop.f32.mrf.mxu0
  %v667 = vadd.f32 %v90, %v666
  %v668 = vpop.f32.mrf.mxu0
  %669 = vdwg.mxu0
  %v670 = vmax.f32 %v352, 0.0
  %v671 = vmax.f32 %v357, 0.0
  %v672 = vmax.f32 %v362, 0.0
  %v673 = vmax.f32 %v367, 0.0
  %v674 = vmax.f32 %v372, 0.0
  %v675 = vmax.f32 %v377, 0.0
  %v676 = vmax.f32 %v382, 0.0
  %v677 = vmax.f32 %v387, 0.0
  %v678 = vmax.f32 %v392, 0.0
  %v679 = vmax.f32 %v397, 0.0
  %v680 = vmax.f32 %v402, 0.0
  %v681 = vmax.f32 %v407, 0.0
  %v682 = vmax.f32 %v412, 0.0
  %v683 = vmax.f32 %v417, 0.0
  %v684 = vmax.f32 %v422, 0.0
  %v685 = vmax.f32 %v427, 0.0
  %v686 = vmax.f32 %v432, 0.0
  %v687 = vmax.f32 %v437, 0.0
  %v688 = vmax.f32 %v442, 0.0
  %v689 = vmax.f32 %v447, 0.0
  %v690 = vmax.f32 %v452, 0.0
  %v691 = vmax.f32 %v457, 0.0
  %v692 = vmax.f32 %v462, 0.0
  %v693 = vmax.f32 %v467, 0.0
  %v694 = vmax.f32 %v472, 0.0
  %v695 = vmax.f32 %v477, 0.0
  %v696 = vmax.f32 %v482, 0.0
  %v697 = vmax.f32 %v487, 0.0
  %v698 = vmax.f32 %v492, 0.0
  %v699 = vmax.f32 %v497, 0.0
  %v700 = vmax.f32 %v502, 0.0
  %v701 = vmax.f32 %v507, 0.0
  %v702 = vmax.f32 %v512, 0.0
  %v703 = vmax.f32 %v517, 0.0
  %v704 = vmax.f32 %v522, 0.0
  %v705 = vmax.f32 %v527, 0.0
  %v706 = vmax.f32 %v532, 0.0
  %v707 = vmax.f32 %v537, 0.0
  %v708 = vmax.f32 %v542, 0.0
  %v709 = vmax.f32 %v547, 0.0
  %v710 = vmax.f32 %v552, 0.0
  %v711 = vmax.f32 %v557, 0.0
  %v712 = vmax.f32 %v562, 0.0
  %v713 = vmax.f32 %v567, 0.0
  %v714 = vmax.f32 %v572, 0.0
  %v715 = vmax.f32 %v577, 0.0
  %v716 = vmax.f32 %v582, 0.0
  %v717 = vmax.f32 %v587, 0.0
  %v718 = vmax.f32 %v592, 0.0
  %v719 = vmax.f32 %v597, 0.0
  %v720 = vmax.f32 %v602, 0.0
  %v721 = vmax.f32 %v607, 0.0
  %v722 = vmax.f32 %v612, 0.0
  %v723 = vmax.f32 %v617, 0.0
  %v724 = vmax.f32 %v622, 0.0
  %v725 = vmax.f32 %v627, 0.0
  %v726 = vmax.f32 %v632, 0.0
  %v727 = vmax.f32 %v637, 0.0
  %v728 = vmax.f32 %v642, 0.0
  %v729 = vmax.f32 %v647, 0.0
  %v730 = vmax.f32 %v652, 0.0
  %v731 = vmax.f32 %v657, 0.0
  %v732 = vmax.f32 %v662, 0.0
  %v733 = vmax.f32 %v667, 0.0
  %v734 = vld [vmem:[%s3] sm:$0xff]
  %v735 = vld [vmem:[%s3 + $0x8] sm:$0xff]
  %v736 = vld [vmem:[%s3 + $0x10] sm:$0xff]
  %v737 = vld [vmem:[%s3 + $0x18] sm:$0xff]
  %v738 = vld [vmem:[%s3 + $0x20] sm:$0xff]
  %v739 = vld [vmem:[%s3 + $0x28] sm:$0xff]
  %v740 = vld [vmem:[%s3 + $0x30] sm:$0xff]
  %v741 = vld [vmem:[%s3 + $0x38] sm:$0xff]
  %v742 = vld [vmem:[%s3 + $0x40] sm:$0xff]
  %v743 = vld [vmem:[%s3 + $0x48] sm:$0xff]
  %v744 = vld [vmem:[%s3 + $0x50] sm:$0xff]
  %v745 = vld [vmem:[%s3 + $0x58] sm:$0xff]
  %v746 = vld [vmem:[%s3 + $0x60] sm:$0xff]
  %v747 = vld [vmem:[%s3 + $0x68] sm:$0xff]
  %v748 = vld [vmem:[%s3 + $0x70] sm:$0xff]
  %v749 = vld [vmem:[%s3 + $0x78] sm:$0xff]
  %750 = vmatprep.subr.mxu0 0.0
  %751 = vmatpush1.msra.mxu0 %v749
  %752 = vmatprep.subr.mxu0 0.0
  %753 = vmatpush1.msra.mxu0 %v748
  %754 = vmatprep.subr.mxu0 0.0
  %755 = vmatpush1.msra.mxu0 %v747
  %756 = vmatprep.subr.mxu0 0.0
  %757 = vmatpush1.msra.mxu0 %v746
  %758 = vmatprep.subr.mxu0 0.0
  %759 = vmatpush1.msra.mxu0 %v745
  %760 = vmatprep.subr.mxu0 0.0
  %761 = vmatpush1.msra.mxu0 %v744
  %762 = vmatprep.subr.mxu0 0.0
  %763 = vmatpush1.msra.mxu0 %v743
  %764 = vmatprep.subr.mxu0 0.0
  %765 = vmatpush1.msra.mxu0 %v742
  %766 = vmatprep.subr.mxu0 0.0
  %767 = vmatpush1.msra.mxu0 %v741
  %768 = vmatprep.subr.mxu0 0.0
  %769 = vmatpush1.msra.mxu0 %v740
  %770 = vmatprep.subr.mxu0 0.0
  %771 = vmatpush1.msra.mxu0 %v739
  %772 = vmatprep.subr.mxu0 0.0
  %773 = vmatpush1.msra.mxu0 %v738
  %774 = vmatprep.subr.mxu0 0.0
  %775 = vmatpush1.msra.mxu0 %v737
  %776 = vmatprep.subr.mxu0 0.0
  %777 = vmatpush1.msra.mxu0 %v736
  %778 = vmatprep.subr.mxu0 0.0
  %779 = vmatpush1.msra.mxu0 %v735
  %780 = vmatprep.subr.mxu0 0.0
  %781 = vmatpush1.msra.mxu0 %v734
  %782 = vmatprep.subr.mxu0 0.0
  %783 = vmatpush2.msra.mxu0 0.0
  %784 = vmatprep.subr.mxu0 0.0
  %785 = vmatpush2.msra.mxu0 0.0
  %786 = vmatprep.subr.mxu0 0.0
  %787 = vmatpush2.msra.mxu0 0.0
  %788 = vmatprep.subr.mxu0 0.0
  %789 = vmatpush2.msra.mxu0 0.0
  %790 = vmatprep.subr.mxu0 0.0
  %791 = vmatpush2.msra.mxu0 0.0
  %792 = vmatprep.subr.mxu0 0.0
  %793 = vmatpush2.msra.mxu0 0.0
  %794 = vmatprep.subr.mxu0 0.0
  %795 = vmatpush2.msra.mxu0 0.0
  %796 = vmatprep.subr.mxu0 0.0
  %797 = vmatpush2.msra.mxu0 0.0
  %798 = vmatprep.subr.mxu0 0.0
  %799 = vmatpush2.msra.mxu0 0.0
  %800 = vmatprep.subr.mxu0 0.0
  %801 = vmatpush2.msra.mxu0 0.0
  %802 = vmatprep.subr.mxu0 0.0
  %803 = vmatpush2.msra.mxu0 0.0
  %804 = vmatprep.subr.mxu0 0.0
  %805 = vmatpush2.msra.mxu0 0.0
  %806 = vmatprep.subr.mxu0 0.0
  %807 = vmatpush2.msra.mxu0 0.0
  %808 = vmatprep.subr.mxu0 0.0
  %809 = vmatpush2.msra.mxu0 0.0
  %810 = vmatprep.subr.mxu0 0.0
  %811 = vmatpush2.msra.mxu0 0.0
  %812 = vmatprep.subr.mxu0 0.0
  %813 = vmatpush2.msra.mxu0 0.0
  %814 = vmatprep.mubr.f32.mxu0 0.0
  %815 = vmatmul.mubr.f32.gmra.mxu0 %v670
  %v816 = vpop.f32.mrf.mxu0
  %v817 = vadd.f32 0.0, %v816
  %v818 = vpop.f32.mrf.mxu0
  %819 = vmatprep.mubr.f32.mxu0 0.0
  %820 = vmatmul.mubr.f32.gmra.mxu0 %v671
  %v821 = vpop.f32.mrf.mxu0
  %v822 = vadd.f32 0.0, %v821
  %v823 = vpop.f32.mrf.mxu0
  %824 = vmatprep.mubr.f32.mxu0 0.0
  %825 = vmatmul.mubr.f32.gmra.mxu0 %v672
  %v826 = vpop.f32.mrf.mxu0
  %v827 = vadd.f32 0.0, %v826
  %v828 = vpop.f32.mrf.mxu0
  %829 = vmatprep.mubr.f32.mxu0 0.0
  %830 = vmatmul.mubr.f32.gmra.mxu0 %v673
  %v831 = vpop.f32.mrf.mxu0
  %v832 = vadd.f32 0.0, %v831
  %v833 = vpop.f32.mrf.mxu0
  %834 = vmatprep.mubr.f32.mxu0 0.0
  %835 = vmatmul.mubr.f32.gmra.mxu0 %v674
  %v836 = vpop.f32.mrf.mxu0
  %v837 = vadd.f32 0.0, %v836
  %v838 = vpop.f32.mrf.mxu0
  %839 = vmatprep.mubr.f32.mxu0 0.0
  %840 = vmatmul.mubr.f32.gmra.mxu0 %v675
  %v841 = vpop.f32.mrf.mxu0
  %v842 = vadd.f32 0.0, %v841
  %v843 = vpop.f32.mrf.mxu0
  %844 = vmatprep.mubr.f32.mxu0 0.0
  %845 = vmatmul.mubr.f32.gmra.mxu0 %v676
  %v846 = vpop.f32.mrf.mxu0
  %v847 = vadd.f32 0.0, %v846
  %v848 = vpop.f32.mrf.mxu0
  %849 = vmatprep.mubr.f32.mxu0 0.0
  %850 = vmatmul.mubr.f32.gmra.mxu0 %v677
  %v851 = vpop.f32.mrf.mxu0
  %v852 = vadd.f32 0.0, %v851
  %v853 = vpop.f32.mrf.mxu0
  %854 = vmatprep.mubr.f32.mxu0 0.0
  %855 = vmatmul.mubr.f32.gmra.mxu0 %v678
  %v856 = vpop.f32.mrf.mxu0
  %v857 = vadd.f32 0.0, %v856
  %v858 = vpop.f32.mrf.mxu0
  %859 = vmatprep.mubr.f32.mxu0 0.0
  %860 = vmatmul.mubr.f32.gmra.mxu0 %v679
  %v861 = vpop.f32.mrf.mxu0
  %v862 = vadd.f32 0.0, %v861
  %v863 = vpop.f32.mrf.mxu0
  %864 = vmatprep.mubr.f32.mxu0 0.0
  %865 = vmatmul.mubr.f32.gmra.mxu0 %v680
  %v866 = vpop.f32.mrf.mxu0
  %v867 = vadd.f32 0.0, %v866
  %v868 = vpop.f32.mrf.mxu0
  %869 = vmatprep.mubr.f32.mxu0 0.0
  %870 = vmatmul.mubr.f32.gmra.mxu0 %v681
  %v871 = vpop.f32.mrf.mxu0
  %v872 = vadd.f32 0.0, %v871
  %v873 = vpop.f32.mrf.mxu0
  %874 = vmatprep.mubr.f32.mxu0 0.0
  %875 = vmatmul.mubr.f32.gmra.mxu0 %v682
  %v876 = vpop.f32.mrf.mxu0
  %v877 = vadd.f32 0.0, %v876
  %v878 = vpop.f32.mrf.mxu0
  %879 = vmatprep.mubr.f32.mxu0 0.0
  %880 = vmatmul.mubr.f32.gmra.mxu0 %v683
  %v881 = vpop.f32.mrf.mxu0
  %v882 = vadd.f32 0.0, %v881
  %v883 = vpop.f32.mrf.mxu0
  %884 = vmatprep.mubr.f32.mxu0 0.0
  %885 = vmatmul.mubr.f32.gmra.mxu0 %v684
  %v886 = vpop.f32.mrf.mxu0
  %v887 = vadd.f32 0.0, %v886
  %v888 = vpop.f32.mrf.mxu0
  %889 = vmatprep.mubr.f32.mxu0 0.0
  %890 = vmatmul.mubr.f32.gmra.mxu0 %v685
  %v891 = vpop.f32.mrf.mxu0
  %v892 = vadd.f32 0.0, %v891
  %v893 = vpop.f32.mrf.mxu0
  %894 = vmatprep.mubr.f32.mxu0 0.0
  %895 = vmatmul.mubr.f32.gmra.mxu0 %v686
  %v896 = vpop.f32.mrf.mxu0
  %v897 = vadd.f32 0.0, %v896
  %v898 = vpop.f32.mrf.mxu0
  %899 = vmatprep.mubr.f32.mxu0 0.0
  %900 = vmatmul.mubr.f32.gmra.mxu0 %v687
  %v901 = vpop.f32.mrf.mxu0
  %v902 = vadd.f32 0.0, %v901
  %v903 = vpop.f32.mrf.mxu0
  %904 = vmatprep.mubr.f32.mxu0 0.0
  %905 = vmatmul.mubr.f32.gmra.mxu0 %v688
  %v906 = vpop.f32.mrf.mxu0
  %v907 = vadd.f32 0.0, %v906
  %v908 = vpop.f32.mrf.mxu0
  %909 = vmatprep.mubr.f32.mxu0 0.0
  %910 = vmatmul.mubr.f32.gmra.mxu0 %v689
  %v911 = vpop.f32.mrf.mxu0
  %v912 = vadd.f32 0.0, %v911
  %v913 = vpop.f32.mrf.mxu0
  %914 = vmatprep.mubr.f32.mxu0 0.0
  %915 = vmatmul.mubr.f32.gmra.mxu0 %v690
  %v916 = vpop.f32.mrf.mxu0
  %v917 = vadd.f32 0.0, %v916
  %v918 = vpop.f32.mrf.mxu0
  %919 = vmatprep.mubr.f32.mxu0 0.0
  %920 = vmatmul.mubr.f32.gmra.mxu0 %v691
  %v921 = vpop.f32.mrf.mxu0
  %v922 = vadd.f32 0.0, %v921
  %v923 = vpop.f32.mrf.mxu0
  %924 = vmatprep.mubr.f32.mxu0 0.0
  %925 = vmatmul.mubr.f32.gmra.mxu0 %v692
  %v926 = vpop.f32.mrf.mxu0
  %v927 = vadd.f32 0.0, %v926
  %v928 = vpop.f32.mrf.mxu0
  %929 = vmatprep.mubr.f32.mxu0 0.0
  %930 = vmatmul.mubr.f32.gmra.mxu0 %v693
  %v931 = vpop.f32.mrf.mxu0
  %v932 = vadd.f32 0.0, %v931
  %v933 = vpop.f32.mrf.mxu0
  %934 = vmatprep.mubr.f32.mxu0 0.0
  %935 = vmatmul.mubr.f32.gmra.mxu0 %v694
  %v936 = vpop.f32.mrf.mxu0
  %v937 = vadd.f32 0.0, %v936
  %v938 = vpop.f32.mrf.mxu0
  %939 = vmatprep.mubr.f32.mxu0 0.0
  %940 = vmatmul.mubr.f32.gmra.mxu0 %v695
  %v941 = vpop.f32.mrf.mxu0
  %v942 = vadd.f32 0.0, %v941
  %v943 = vpop.f32.mrf.mxu0
  %944 = vmatprep.mubr.f32.mxu0 0.0
  %945 = vmatmul.mubr.f32.gmra.mxu0 %v696
  %v946 = vpop.f32.mrf.mxu0
  %v947 = vadd.f32 0.0, %v946
  %v948 = vpop.f32.mrf.mxu0
  %949 = vmatprep.mubr.f32.mxu0 0.0
  %950 = vmatmul.mubr.f32.gmra.mxu0 %v697
  %v951 = vpop.f32.mrf.mxu0
  %v952 = vadd.f32 0.0, %v951
  %v953 = vpop.f32.mrf.mxu0
  %954 = vmatprep.mubr.f32.mxu0 0.0
  %955 = vmatmul.mubr.f32.gmra.mxu0 %v698
  %v956 = vpop.f32.mrf.mxu0
  %v957 = vadd.f32 0.0, %v956
  %v958 = vpop.f32.mrf.mxu0
  %959 = vmatprep.mubr.f32.mxu0 0.0
  %960 = vmatmul.mubr.f32.gmra.mxu0 %v699
  %v961 = vpop.f32.mrf.mxu0
  %v962 = vadd.f32 0.0, %v961
  %v963 = vpop.f32.mrf.mxu0
  %964 = vmatprep.mubr.f32.mxu0 0.0
  %965 = vmatmul.mubr.f32.gmra.mxu0 %v700
  %v966 = vpop.f32.mrf.mxu0
  %v967 = vadd.f32 0.0, %v966
  %v968 = vpop.f32.mrf.mxu0
  %969 = vmatprep.mubr.f32.mxu0 0.0
  %970 = vmatmul.mubr.f32.gmra.mxu0 %v701
  %v971 = vpop.f32.mrf.mxu0
  %v972 = vadd.f32 0.0, %v971
  %v973 = vpop.f32.mrf.mxu0
  %974 = vmatprep.mubr.f32.mxu0 0.0
  %975 = vmatmul.mubr.f32.gmra.mxu0 %v702
  %v976 = vpop.f32.mrf.mxu0
  %v977 = vadd.f32 0.0, %v976
  %v978 = vpop.f32.mrf.mxu0
  %979 = vmatprep.mubr.f32.mxu0 0.0
  %980 = vmatmul.mubr.f32.gmra.mxu0 %v703
  %v981 = vpop.f32.mrf.mxu0
  %v982 = vadd.f32 0.0, %v981
  %v983 = vpop.f32.mrf.mxu0
  %984 = vmatprep.mubr.f32.mxu0 0.0
  %985 = vmatmul.mubr.f32.gmra.mxu0 %v704
  %v986 = vpop.f32.mrf.mxu0
  %v987 = vadd.f32 0.0, %v986
  %v988 = vpop.f32.mrf.mxu0
  %989 = vmatprep.mubr.f32.mxu0 0.0
  %990 = vmatmul.mubr.f32.gmra.mxu0 %v705
  %v991 = vpop.f32.mrf.mxu0
  %v992 = vadd.f32 0.0, %v991
  %v993 = vpop.f32.mrf.mxu0
  %994 = vmatprep.mubr.f32.mxu0 0.0
  %995 = vmatmul.mubr.f32.gmra.mxu0 %v706
  %v996 = vpop.f32.mrf.mxu0
  %v997 = vadd.f32 0.0, %v996
  %v998 = vpop.f32.mrf.mxu0
  %999 = vmatprep.mubr.f32.mxu0 0.0
  %1000 = vmatmul.mubr.f32.gmra.mxu0 %v707
  %v1001 = vpop.f32.mrf.mxu0
  %v1002 = vadd.f32 0.0, %v1001
  %v1003 = vpop.f32.mrf.mxu0
  %1004 = vmatprep.mubr.f32.mxu0 0.0
  %1005 = vmatmul.mubr.f32.gmra.mxu0 %v708
  %v1006 = vpop.f32.mrf.mxu0
  %v1007 = vadd.f32 0.0, %v1006
  %v1008 = vpop.f32.mrf.mxu0
  %1009 = vmatprep.mubr.f32.mxu0 0.0
  %1010 = vmatmul.mubr.f32.gmra.mxu0 %v709
  %v1011 = vpop.f32.mrf.mxu0
  %v1012 = vadd.f32 0.0, %v1011
  %v1013 = vpop.f32.mrf.mxu0
  %1014 = vmatprep.mubr.f32.mxu0 0.0
  %1015 = vmatmul.mubr.f32.gmra.mxu0 %v710
  %v1016 = vpop.f32.mrf.mxu0
  %v1017 = vadd.f32 0.0, %v1016
  %v1018 = vpop.f32.mrf.mxu0
  %1019 = vmatprep.mubr.f32.mxu0 0.0
  %1020 = vmatmul.mubr.f32.gmra.mxu0 %v711
  %v1021 = vpop.f32.mrf.mxu0
  %v1022 = vadd.f32 0.0, %v1021
  %v1023 = vpop.f32.mrf.mxu0
  %1024 = vmatprep.mubr.f32.mxu0 0.0
  %1025 = vmatmul.mubr.f32.gmra.mxu0 %v712
  %v1026 = vpop.f32.mrf.mxu0
  %v1027 = vadd.f32 0.0, %v1026
  %v1028 = vpop.f32.mrf.mxu0
  %1029 = vmatprep.mubr.f32.mxu0 0.0
  %1030 = vmatmul.mubr.f32.gmra.mxu0 %v713
  %v1031 = vpop.f32.mrf.mxu0
  %v1032 = vadd.f32 0.0, %v1031
  %v1033 = vpop.f32.mrf.mxu0
  %1034 = vmatprep.mubr.f32.mxu0 0.0
  %1035 = vmatmul.mubr.f32.gmra.mxu0 %v714
  %v1036 = vpop.f32.mrf.mxu0
  %v1037 = vadd.f32 0.0, %v1036
  %v1038 = vpop.f32.mrf.mxu0
  %1039 = vmatprep.mubr.f32.mxu0 0.0
  %1040 = vmatmul.mubr.f32.gmra.mxu0 %v715
  %v1041 = vpop.f32.mrf.mxu0
  %v1042 = vadd.f32 0.0, %v1041
  %v1043 = vpop.f32.mrf.mxu0
  %1044 = vmatprep.mubr.f32.mxu0 0.0
  %1045 = vmatmul.mubr.f32.gmra.mxu0 %v716
  %v1046 = vpop.f32.mrf.mxu0
  %v1047 = vadd.f32 0.0, %v1046
  %v1048 = vpop.f32.mrf.mxu0
  %1049 = vmatprep.mubr.f32.mxu0 0.0
  %1050 = vmatmul.mubr.f32.gmra.mxu0 %v717
  %v1051 = vpop.f32.mrf.mxu0
  %v1052 = vadd.f32 0.0, %v1051
  %v1053 = vpop.f32.mrf.mxu0
  %1054 = vmatprep.mubr.f32.mxu0 0.0
  %1055 = vmatmul.mubr.f32.gmra.mxu0 %v718
  %v1056 = vpop.f32.mrf.mxu0
  %v1057 = vadd.f32 0.0, %v1056
  %v1058 = vpop.f32.mrf.mxu0
  %1059 = vmatprep.mubr.f32.mxu0 0.0
  %1060 = vmatmul.mubr.f32.gmra.mxu0 %v719
  %v1061 = vpop.f32.mrf.mxu0
  %v1062 = vadd.f32 0.0, %v1061
  %v1063 = vpop.f32.mrf.mxu0
  %1064 = vmatprep.mubr.f32.mxu0 0.0
  %1065 = vmatmul.mubr.f32.gmra.mxu0 %v720
  %v1066 = vpop.f32.mrf.mxu0
  %v1067 = vadd.f32 0.0, %v1066
  %v1068 = vpop.f32.mrf.mxu0
  %1069 = vmatprep.mubr.f32.mxu0 0.0
  %1070 = vmatmul.mubr.f32.gmra.mxu0 %v721
  %v1071 = vpop.f32.mrf.mxu0
  %v1072 = vadd.f32 0.0, %v1071
  %v1073 = vpop.f32.mrf.mxu0
  %1074 = vmatprep.mubr.f32.mxu0 0.0
  %1075 = vmatmul.mubr.f32.gmra.mxu0 %v722
  %v1076 = vpop.f32.mrf.mxu0
  %v1077 = vadd.f32 0.0, %v1076
  %v1078 = vpop.f32.mrf.mxu0
  %1079 = vmatprep.mubr.f32.mxu0 0.0
  %1080 = vmatmul.mubr.f32.gmra.mxu0 %v723
  %v1081 = vpop.f32.mrf.mxu0
  %v1082 = vadd.f32 0.0, %v1081
  %v1083 = vpop.f32.mrf.mxu0
  %1084 = vmatprep.mubr.f32.mxu0 0.0
  %1085 = vmatmul.mubr.f32.gmra.mxu0 %v724
  %v1086 = vpop.f32.mrf.mxu0
  %v1087 = vadd.f32 0.0, %v1086
  %v1088 = vpop.f32.mrf.mxu0
  %1089 = vmatprep.mubr.f32.mxu0 0.0
  %1090 = vmatmul.mubr.f32.gmra.mxu0 %v725
  %v1091 = vpop.f32.mrf.mxu0
  %v1092 = vadd.f32 0.0, %v1091
  %v1093 = vpop.f32.mrf.mxu0
  %1094 = vmatprep.mubr.f32.mxu0 0.0
  %1095 = vmatmul.mubr.f32.gmra.mxu0 %v726
  %v1096 = vpop.f32.mrf.mxu0
  %v1097 = vadd.f32 0.0, %v1096
  %v1098 = vpop.f32.mrf.mxu0
  %1099 = vmatprep.mubr.f32.mxu0 0.0
  %1100 = vmatmul.mubr.f32.gmra.mxu0 %v727
  %v1101 = vpop.f32.mrf.mxu0
  %v1102 = vadd.f32 0.0, %v1101
  %v1103 = vpop.f32.mrf.mxu0
  %1104 = vmatprep.mubr.f32.mxu0 0.0
  %1105 = vmatmul.mubr.f32.gmra.mxu0 %v728
  %v1106 = vpop.f32.mrf.mxu0
  %v1107 = vadd.f32 0.0, %v1106
  %v1108 = vpop.f32.mrf.mxu0
  %1109 = vmatprep.mubr.f32.mxu0 0.0
  %1110 = vmatmul.mubr.f32.gmra.mxu0 %v729
  %v1111 = vpop.f32.mrf.mxu0
  %v1112 = vadd.f32 0.0, %v1111
  %v1113 = vpop.f32.mrf.mxu0
  %1114 = vmatprep.mubr.f32.mxu0 0.0
  %1115 = vmatmul.mubr.f32.gmra.mxu0 %v730
  %v1116 = vpop.f32.mrf.mxu0
  %v1117 = vadd.f32 0.0, %v1116
  %v1118 = vpop.f32.mrf.mxu0
  %1119 = vmatprep.mubr.f32.mxu0 0.0
  %1120 = vmatmul.mubr.f32.gmra.mxu0 %v731
  %v1121 = vpop.f32.mrf.mxu0
  %v1122 = vadd.f32 0.0, %v1121
  %v1123 = vpop.f32.mrf.mxu0
  %1124 = vmatprep.mubr.f32.mxu0 0.0
  %1125 = vmatmul.mubr.f32.gmra.mxu0 %v732
  %v1126 = vpop.f32.mrf.mxu0
  %v1127 = vadd.f32 0.0, %v1126
  %v1128 = vpop.f32.mrf.mxu0
  %1129 = vmatprep.mubr.f32.mxu0 0.0
  %1130 = vmatmul.mubr.f32.gmra.mxu0 %v733
  %v1131 = vpop.f32.mrf.mxu0
  %v1132 = vadd.f32 0.0, %v1131
  %v1133 = vpop.f32.mrf.mxu0
  %1134 = vdwg.mxu0
  %v1135 = vmax.f32 %v817, 0.0
  %v1136 = vmax.f32 %v822, 0.0
  %v1137 = vmax.f32 %v827, 0.0
  %v1138 = vmax.f32 %v832, 0.0
  %v1139 = vmax.f32 %v837, 0.0
  %v1140 = vmax.f32 %v842, 0.0
  %v1141 = vmax.f32 %v847, 0.0
  %v1142 = vmax.f32 %v852, 0.0
  %v1143 = vmax.f32 %v857, 0.0
  %v1144 = vmax.f32 %v862, 0.0
  %v1145 = vmax.f32 %v867, 0.0
  %v1146 = vmax.f32 %v872, 0.0
  %v1147 = vmax.f32 %v877, 0.0
  %v1148 = vmax.f32 %v882, 0.0
  %v1149 = vmax.f32 %v887, 0.0
  %v1150 = vmax.f32 %v892, 0.0
  %v1151 = vmax.f32 %v897, 0.0
  %v1152 = vmax.f32 %v902, 0.0
  %v1153 = vmax.f32 %v907, 0.0
  %v1154 = vmax.f32 %v912, 0.0
  %v1155 = vmax.f32 %v917, 0.0
  %v1156 = vmax.f32 %v922, 0.0
  %v1157 = vmax.f32 %v927, 0.0
  %v1158 = vmax.f32 %v932, 0.0
  %v1159 = vmax.f32 %v937, 0.0
  %v1160 = vmax.f32 %v942, 0.0
  %v1161 = vmax.f32 %v947, 0.0
  %v1162 = vmax.f32 %v952, 0.0
  %v1163 = vmax.f32 %v957, 0.0
  %v1164 = vmax.f32 %v962, 0.0
  %v1165 = vmax.f32 %v967, 0.0
  %v1166 = vmax.f32 %v972, 0.0
  %v1167 = vmax.f32 %v977, 0.0
  %v1168 = vmax.f32 %v982, 0.0
  %v1169 = vmax.f32 %v987, 0.0
  %v1170 = vmax.f32 %v992, 0.0
  %v1171 = vmax.f32 %v997, 0.0
  %v1172 = vmax.f32 %v1002, 0.0
  %v1173 = vmax.f32 %v1007, 0.0
  %v1174 = vmax.f32 %v1012, 0.0
  %v1175 = vmax.f32 %v1017, 0.0
  %v1176 = vmax.f32 %v1022, 0.0
  %v1177 = vmax.f32 %v1027, 0.0
  %v1178 = vmax.f32 %v1032, 0.0
  %v1179 = vmax.f32 %v1037, 0.0
  %v1180 = vmax.f32 %v1042, 0.0
  %v1181 = vmax.f32 %v1047, 0.0
  %v1182 = vmax.f32 %v1052, 0.0
  %v1183 = vmax.f32 %v1057, 0.0
  %v1184 = vmax.f32 %v1062, 0.0
  %v1185 = vmax.f32 %v1067, 0.0
  %v1186 = vmax.f32 %v1072, 0.0
  %v1187 = vmax.f32 %v1077, 0.0
  %v1188 = vmax.f32 %v1082, 0.0
  %v1189 = vmax.f32 %v1087, 0.0
  %v1190 = vmax.f32 %v1092, 0.0
  %v1191 = vmax.f32 %v1097, 0.0
  %v1192 = vmax.f32 %v1102, 0.0
  %v1193 = vmax.f32 %v1107, 0.0
  %v1194 = vmax.f32 %v1112, 0.0
  %v1195 = vmax.f32 %v1117, 0.0
  %v1196 = vmax.f32 %v1122, 0.0
  %v1197 = vmax.f32 %v1127, 0.0
  %v1198 = vmax.f32 %v1132, 0.0
  %vm1199 = vcmask 7168
  %1200 = vst.msk [vmem:[%s4] sm:$0xff] %vm1199, %v1135
  %1201 = vst.msk [vmem:[%s4 + $0x8] sm:$0xff] %vm1199, %v1136
  %1202 = vst.msk [vmem:[%s4 + $0x10] sm:$0xff] %vm1199, %v1137
  %1203 = vst.msk [vmem:[%s4 + $0x18] sm:$0xff] %vm1199, %v1138
  %1204 = vst.msk [vmem:[%s4 + $0x20] sm:$0xff] %vm1199, %v1139
  %1205 = vst.msk [vmem:[%s4 + $0x28] sm:$0xff] %vm1199, %v1140
  %1206 = vst.msk [vmem:[%s4 + $0x30] sm:$0xff] %vm1199, %v1141
  %1207 = vst.msk [vmem:[%s4 + $0x38] sm:$0xff] %vm1199, %v1142
  %1208 = vst.msk [vmem:[%s4 + $0x40] sm:$0xff] %vm1199, %v1143
  %1209 = vst.msk [vmem:[%s4 + $0x48] sm:$0xff] %vm1199, %v1144
  %1210 = vst.msk [vmem:[%s4 + $0x50] sm:$0xff] %vm1199, %v1145
  %1211 = vst.msk [vmem:[%s4 + $0x58] sm:$0xff] %vm1199, %v1146
  %1212 = vst.msk [vmem:[%s4 + $0x60] sm:$0xff] %vm1199, %v1147
  %1213 = vst.msk [vmem:[%s4 + $0x68] sm:$0xff] %vm1199, %v1148
  %1214 = vst.msk [vmem:[%s4 + $0x70] sm:$0xff] %vm1199, %v1149
  %1215 = vst.msk [vmem:[%s4 + $0x78] sm:$0xff] %vm1199, %v1150
  %1216 = vst.msk [vmem:[%s4 + $0x80] sm:$0xff] %vm1199, %v1151
  %1217 = vst.msk [vmem:[%s4 + $0x88] sm:$0xff] %vm1199, %v1152
  %1218 = vst.msk [vmem:[%s4 + $0x90] sm:$0xff] %vm1199, %v1153
  %1219 = vst.msk [vmem:[%s4 + $0x98] sm:$0xff] %vm1199, %v1154
  %1220 = vst.msk [vmem:[%s4 + $0xa0] sm:$0xff] %vm1199, %v1155
  %1221 = vst.msk [vmem:[%s4 + $0xa8] sm:$0xff] %vm1199, %v1156
  %1222 = vst.msk [vmem:[%s4 + $0xb0] sm:$0xff] %vm1199, %v1157
  %1223 = vst.msk [vmem:[%s4 + $0xb8] sm:$0xff] %vm1199, %v1158
  %1224 = vst.msk [vmem:[%s4 + $0xc0] sm:$0xff] %vm1199, %v1159
  %1225 = vst.msk [vmem:[%s4 + $0xc8] sm:$0xff] %vm1199, %v1160
  %1226 = vst.msk [vmem:[%s4 + $0xd0] sm:$0xff] %vm1199, %v1161
  %1227 = vst.msk [vmem:[%s4 + $0xd8] sm:$0xff] %vm1199, %v1162
  %1228 = vst.msk [vmem:[%s4 + $0xe0] sm:$0xff] %vm1199, %v1163
  %1229 = vst.msk [vmem:[%s4 + $0xe8] sm:$0xff] %vm1199, %v1164
  %1230 = vst.msk [vmem:[%s4 + $0xf0] sm:$0xff] %vm1199, %v1165
  %1231 = vst.msk [vmem:[%s4 + $0xf8] sm:$0xff] %vm1199, %v1166
  %1232 = vst.msk [vmem:[%s4 + $0x100] sm:$0xff] %vm1199, %v1167
  %1233 = vst.msk [vmem:[%s4 + $0x108] sm:$0xff] %vm1199, %v1168
  %1234 = vst.msk [vmem:[%s4 + $0x110] sm:$0xff] %vm1199, %v1169
  %1235 = vst.msk [vmem:[%s4 + $0x118] sm:$0xff] %vm1199, %v1170
  %1236 = vst.msk [vmem:[%s4 + $0x120] sm:$0xff] %vm1199, %v1171
  %1237 = vst.msk [vmem:[%s4 + $0x128] sm:$0xff] %vm1199, %v1172
  %1238 = vst.msk [vmem:[%s4 + $0x130] sm:$0xff] %vm1199, %v1173
  %1239 = vst.msk [vmem:[%s4 + $0x138] sm:$0xff] %vm1199, %v1174
  %1240 = vst.msk [vmem:[%s4 + $0x140] sm:$0xff] %vm1199, %v1175
  %1241 = vst.msk [vmem:[%s4 + $0x148] sm:$0xff] %vm1199, %v1176
  %1242 = vst.msk [vmem:[%s4 + $0x150] sm:$0xff] %vm1199, %v1177
  %1243 = vst.msk [vmem:[%s4 + $0x158] sm:$0xff] %vm1199, %v1178
  %1244 = vst.msk [vmem:[%s4 + $0x160] sm:$0xff] %vm1199, %v1179
  %1245 = vst.msk [vmem:[%s4 + $0x168] sm:$0xff] %vm1199, %v1180
  %1246 = vst.msk [vmem:[%s4 + $0x170] sm:$0xff] %vm1199, %v1181
  %1247 = vst.msk [vmem:[%s4 + $0x178] sm:$0xff] %vm1199, %v1182
  %1248 = vst.msk [vmem:[%s4 + $0x180] sm:$0xff] %vm1199, %v1183
  %1249 = vst.msk [vmem:[%s4 + $0x188] sm:$0xff] %vm1199, %v1184
  %1250 = vst.msk [vmem:[%s4 + $0x190] sm:$0xff] %vm1199, %v1185
  %1251 = vst.msk [vmem:[%s4 + $0x198] sm:$0xff] %vm1199, %v1186
  %1252 = vst.msk [vmem:[%s4 + $0x1a0] sm:$0xff] %vm1199, %v1187
  %1253 = vst.msk [vmem:[%s4 + $0x1a8] sm:$0xff] %vm1199, %v1188
  %1254 = vst.msk [vmem:[%s4 + $0x1b0] sm:$0xff] %vm1199, %v1189
  %1255 = vst.msk [vmem:[%s4 + $0x1b8] sm:$0xff] %vm1199, %v1190
  %1256 = vst.msk [vmem:[%s4 + $0x1c0] sm:$0xff] %vm1199, %v1191
  %1257 = vst.msk [vmem:[%s4 + $0x1c8] sm:$0xff] %vm1199, %v1192
  %1258 = vst.msk [vmem:[%s4 + $0x1d0] sm:$0xff] %vm1199, %v1193
  %1259 = vst.msk [vmem:[%s4 + $0x1d8] sm:$0xff] %vm1199, %v1194
  %1260 = vst.msk [vmem:[%s4 + $0x1e0] sm:$0xff] %vm1199, %v1195
  %1261 = vst.msk [vmem:[%s4 + $0x1e8] sm:$0xff] %vm1199, %v1196
  %1262 = vst.msk [vmem:[%s4 + $0x1f0] sm:$0xff] %vm1199, %v1197
  %1263 = vst.msk [vmem:[%s4 + $0x1f8] sm:$0xff] %vm1199, %v1198
  // Predicated region
  $region18: #{tpu_custom_call.1} parent=0 // pred_check
    _
  $region19: #{tpu_custom_call.1} parent=0 // pred_check_branch
    %1265 = sbr.rel (0) target = $region21
  $region20: #{tpu_custom_call.1} parent=0 // pred_region
    _
  $region21: #{tpu_custom_call.1} parent=0 // pred_fallthru
    _
  // Predicated region
  $region22: #{tpu_custom_call.1} parent=0 // pred_check
    _
  $region23: #{tpu_custom_call.1} parent=0 // pred_check_branch
    %1267 = sbr.rel (0) target = $region25
  $region24: #{tpu_custom_call.1} parent=0 // pred_region
    _
  $region25: #{tpu_custom_call.1} parent=0 // pred_fallthru
    _

</llo_original>
